<compile_context>
chip_gen: v5e
topology: v5e:2x2
jax: 0.10.0
libtpu: 0.0.40
codegen_flags: <defaults>
</compile_context>

<pallas_src>
import jax
import jax.numpy as jnp
from jax import lax
from jax.experimental import pallas as pl
from jax.experimental.pallas import tpu as pltpu

EPS = 1e-8  # torch.cosine_similarity default eps


def _attention_kernel(ctx_ref, attr_ref, out_ref):
    # ctx_ref : (1, TS, D)  context tile for one batch element (native dtype)
    # attr_ref: (1, 1, D)   attribute row for the same batch element
    # out_ref : (1, TS, D)
    c = ctx_ref[...]
    a = attr_ref[...]

    c_f = c.astype(jnp.float32)
    a_f = a.astype(jnp.float32)

    dot = jnp.sum(c_f * a_f, axis=-1, keepdims=True)     # (1, TS, 1)
    c_sq = jnp.sum(c_f * c_f, axis=-1, keepdims=True)    # (1, TS, 1)
    a_sq = jnp.sum(a_f * a_f, axis=-1, keepdims=True)    # (1, 1, 1)

    # Exact torch eps semantics via a single rsqrt:
    #   max(sqrt(x)*sqrt(y), eps) == sqrt(max(x*y, eps^2))   for x, y >= 0.
    cos = dot * lax.rsqrt(jnp.maximum(c_sq * a_sq, EPS * EPS))  # (1, TS, 1)

    # Final scale in the input dtype (bf16 VALU on v6e/v7x); reductions stay f32.
    out_ref[...] = c * cos.astype(c.dtype)


def _round_up(x, m):
    return (x + m - 1) // m * m


def _vmem_budget_bytes():
    """(tile budget, vmem_limit_bytes) — conservative (v7x-safe) by default."""
    try:
        info = pltpu.get_tpu_info()
        vmem = getattr(info, "vmem_capacity_bytes", None)
        if vmem is not None and vmem >= 96 * 1024 * 1024:
            # v5e / v6e: 128 MiB physical VMEM — give the pipeliner more slack.
            return 24 * 1024 * 1024, 64 * 1024 * 1024
    except Exception:
        pass
    # v7x (64 MiB physical, 32 MiB scoped default) or unknown: stay safe.
    return 12 * 1024 * 1024, 32 * 1024 * 1024


def _choose_seq_tile(B, S, D, itemsize, pack, vmem_budget_bytes):
    # VMEM footprint per sequence row: double-buffered input + output tiles
    # (4 * itemsize bytes/elem) plus ~8 bytes/elem of f32 temporaries.
    # The lane dim is physically padded to 128 inside VMEM regardless of D.
    d_lanes = _round_up(D, 128)
    per_row = d_lanes * (4 * itemsize + 8)
    ts = max(pack, vmem_budget_bytes // per_row)
    ts = min(ts, 1024)  # diminishing returns past ~1K rows

    # Parallelism / pipelining cap: aim for B * cdiv(S, ts) >= 8 grid points
    # (2 TensorCores on v7x + enough steps to hide DMA), but never shrink the
    # tile below 128 rows just for that.
    min_steps = -(-8 // B)          # ceil(8 / B)
    ts_cap = -(-S // min_steps)     # ceil(S / min_steps)
    ts = min(ts, max(128, ts_cap))

    if ts >= S:
        return S                    # full-dim block: always layout-legal
    ts = max(pack, (ts // pack) * pack)   # sublane-pack aligned
    if ts >= S:
        return S
    return ts


def attention_pallas(context_output, attribute_output):
    """context_output: (B, S, D), attribute_output: (B, D) -> (B, S, D)."""
    B, S, D = context_output.shape
    assert attribute_output.shape == (B, D)
    dtype = context_output.dtype
    itemsize = jnp.dtype(dtype).itemsize
    pack = max(8, (8 * 4) // itemsize)  # sublane pack: 8 f32, 16 bf16, 32 int8

    vmem_budget, vmem_limit = _vmem_budget_bytes()
    ts = _choose_seq_tile(B, S, D, itemsize, pack, vmem_budget)

    # (B, D) -> (B, 1, D): metadata-only reshape so the block (1, 1, D) is
    # layout-clean (both trailing block dims equal the full array dims).
    attr = attribute_output.reshape(B, 1, D)

    grid = (B, pl.cdiv(S, ts))

    bytes_accessed = (2 * B * S * D + B * D) * itemsize
    cost = pl.CostEstimate(
        flops=5 * B * S * D,
        transcendentals=B * S,
        bytes_accessed=int(bytes_accessed),
    )

    return pl.pallas_call(
        _attention_kernel,
        out_shape=jax.ShapeDtypeStruct((B, S, D), dtype),
        grid_spec=pltpu.PrefetchScalarGridSpec(
            num_scalar_prefetch=0,
            grid=grid,
            in_specs=[
                pl.BlockSpec((1, ts, D), lambda b, s: (b, s, 0)),
                pl.BlockSpec((1, 1, D), lambda b, s: (b, 0, 0)),
            ],
            out_specs=pl.BlockSpec((1, ts, D), lambda b, s: (b, s, 0)),
        ),
        compiler_params=pltpu.CompilerParams(
            dimension_semantics=("parallel", "parallel"),
            vmem_limit_bytes=vmem_limit,
        ),
        cost_estimate=cost,
    )(context_output, attr)


def attention_ref(context_output, attribute_output):
    # Pure-JAX reference mirroring the PyTorch forward.
    c = context_output.astype(jnp.float32)
    a = attribute_output.astype(jnp.float32)[:, None, :]        # (B, 1, D)
    dot = jnp.sum(c * a, axis=-1)                                # (B, S)
    cn = jnp.sqrt(jnp.sum(c * c, axis=-1))                       # (B, S)
    an = jnp.sqrt(jnp.sum(a * a, axis=-1))                       # (B, 1)
    cos = dot / jnp.maximum(cn * an, EPS)                        # (B, S)
    return (c * cos[..., None]).astype(context_output.dtype)


if __name__ == "__main__":
    key = jax.random.PRNGKey(0)
    k1, k2 = jax.random.split(key)

    B, S, D = 2, 8, 32
    context_output = jax.random.normal(k1, (B, S, D), dtype=jnp.float32)
    attribute_output = jax.random.normal(k2, (B, D), dtype=jnp.float32)

    out = attention_pallas(context_output, attribute_output)
    out = jax.block_until_ready(out)

    ref = attention_ref(context_output, attribute_output)
    assert out.shape == (B, S, D)
    assert jnp.allclose(out, ref, atol=1e-5, rtol=1e-5), "mismatch vs reference"

    print("KERNEL_OK")
</pallas_src>

<mosaic_0001>
module attributes {stable_mosaic.version = 11 : i64} {
  func.func @_attention_kernel(%arg0: i32, %arg1: i32, %arg2: memref<1x8x32xf32, #tpu.memory_space<vmem>>, %arg3: memref<1x1x32xf32, #tpu.memory_space<vmem>>, %arg4: memref<1x8x32xf32, #tpu.memory_space<vmem>>) attributes {dimension_semantics = [#tpu.dimension_semantics<parallel>, #tpu.dimension_semantics<parallel>], iteration_bounds = array<i64: 2, 1>, scalar_prefetch = 0 : i64, scratch_operands = 0 : i64, tpu.core_type = #tpu.core_type<tc>, window_params = [{transform_indices = @transform_0, window_bounds = array<i64: 1, 8, 32>}, {transform_indices = @transform_1, window_bounds = array<i64: 1, 1, 32>}, {transform_indices = @transform_2, window_bounds = array<i64: 1, 8, 32>}]} {
    %c0 = arith.constant 0 : index
    %c0_0 = arith.constant 0 : index
    %c0_1 = arith.constant 0 : index
    %0 = vector.load %arg2[%c0, %c0_0, %c0_1] : memref<1x8x32xf32, #tpu.memory_space<vmem>>, vector<1x8x32xf32>
    %c0_2 = arith.constant 0 : index
    %c0_3 = arith.constant 0 : index
    %c0_4 = arith.constant 0 : index
    %1 = vector.load %arg3[%c0_2, %c0_3, %c0_4] : memref<1x1x32xf32, #tpu.memory_space<vmem>>, vector<1x1x32xf32>
    %2 = vector.broadcast %1 : vector<1x1x32xf32> to vector<1x8x32xf32>
    %3 = arith.mulf %0, %2 : vector<1x8x32xf32>
    %cst = arith.constant dense<0.000000e+00> : vector<1x8xf32>
    %4 = vector.multi_reduction <add>, %3, %cst [2] : vector<1x8x32xf32> to vector<1x8xf32>
    %5 = vector.shape_cast %4 : vector<1x8xf32> to vector<1x8x1xf32>
    %6 = arith.mulf %0, %0 : vector<1x8x32xf32>
    %cst_5 = arith.constant dense<0.000000e+00> : vector<1x8xf32>
    %7 = vector.multi_reduction <add>, %6, %cst_5 [2] : vector<1x8x32xf32> to vector<1x8xf32>
    %8 = vector.shape_cast %7 : vector<1x8xf32> to vector<1x8x1xf32>
    %9 = arith.mulf %1, %1 : vector<1x1x32xf32>
    %cst_6 = arith.constant dense<0.000000e+00> : vector<1x1xf32>
    %10 = vector.multi_reduction <add>, %9, %cst_6 [2] : vector<1x1x32xf32> to vector<1x1xf32>
    %11 = vector.shape_cast %10 : vector<1x1xf32> to vector<1x1x1xf32>
    %12 = vector.broadcast %11 : vector<1x1x1xf32> to vector<1x8x1xf32>
    %13 = arith.mulf %8, %12 : vector<1x8x1xf32>
    %cst_7 = arith.constant 1.000000e-16 : f32
    %14 = vector.broadcast %cst_7 : f32 to vector<1x8x1xf32>
    %15 = arith.maximumf %13, %14 : vector<1x8x1xf32>
    %16 = math.rsqrt %15 : vector<1x8x1xf32>
    %17 = arith.mulf %5, %16 : vector<1x8x1xf32>
    %18 = vector.broadcast %17 : vector<1x8x1xf32> to vector<1x8x32xf32>
    %19 = arith.mulf %0, %18 : vector<1x8x32xf32>
    %c0_8 = arith.constant 0 : index
    %c0_9 = arith.constant 0 : index
    %c0_10 = arith.constant 0 : index
    %20 = vector.load %arg4[%c0_8, %c0_9, %c0_10] : memref<1x8x32xf32, #tpu.memory_space<vmem>>, vector<1x8x32xf32>
    tpu.vector_store %arg4[%c0_8, %c0_9, %c0_10], %19 {strides = array<i32>} : memref<1x8x32xf32, #tpu.memory_space<vmem>>, vector<1x8x32xf32>,
    return
  }
  func.func @transform_0(%arg0: i32, %arg1: i32) -> (i32, i32, i32) {
    %c0_i32 = arith.constant 0 : i32
    %c0_i32_0 = arith.constant 0 : i32
    return %arg0, %arg1, %c0_i32 : i32, i32, i32
  }
  func.func @transform_1(%arg0: i32, %arg1: i32) -> (i32, i32, i32) {
    %c0_i32 = arith.constant 0 : i32
    %c0_i32_0 = arith.constant 0 : i32
    %c0_i32_1 = arith.constant 0 : i32
    return %arg0, %c0_i32, %c0_i32_0 : i32, i32, i32
  }
  func.func @transform_2(%arg0: i32, %arg1: i32) -> (i32, i32, i32) {
    %c0_i32 = arith.constant 0 : i32
    %c0_i32_0 = arith.constant 0 : i32
    return %arg0, %arg1, %c0_i32 : i32, i32, i32
  }
}

</mosaic_0001>

<llo_original>
// kernel: tpu_custom_call.1
$region0: #{tpu_custom_call.1}
  #allocation0 [shape = 'u32[]', space=smem, size = 0x4, offset = 0x4, fixed_abs, tag = 'smem constant byte address 0x4 - core index']
  #allocation1 [shape = 'u32[72,128]{1,0:T(1,128)}', space=vmem, size = 0x9000, scoped, tag = 'internal scratch']
  %s0 = inlined_call_operand.hbm [shape: f32[2,8,32], index: 0, kind: input, shape index: {}]
  %s1 = inlined_call_operand.hbm [shape: f32[2,1,32], index: 1, kind: input, shape index: {}]
  %s2 = inlined_call_operand.hbm [shape: f32[2,8,32], index: 2, kind: output, shape index: {}]
  %s3 = sld [smem:[#allocation0]]
  $region49: #{tpu_custom_call.1} parent=0
    _
  %s5 = ssub.s32 1, %s3
  %s6 = scalar_select 0, %s5, %s3
  $region1: #{tpu_custom_call.1} parent=0
    #allocation2 [shape = 'u8[8192]{0}', space=vmem, size = 0x2000, scoped, tag = 'input window, operand 0']
    #allocation3 [shape = 's32[2]{0}', space=sflag, size = 0x8, scoped, tag = 'scoped memory for tpu_custom_call.1']
    #allocation4 [shape = 's32[2]{0}', space=sflag, size = 0x8, scoped, tag = 'scoped memory for tpu_custom_call.1']
    #allocation5 [shape = 'u8[1024]{0}', space=vmem, size = 0x400, scoped, tag = 'input window, operand 1']
    #allocation6 [shape = 's32[2]{0}', space=sflag, size = 0x8, scoped, tag = 'scoped memory for tpu_custom_call.1']
    #allocation7 [shape = 'u8[8192]{0}', space=vmem, size = 0x2000, scoped, tag = 'output window, operand 0']
    %7 = vsyncpa [#allocation3], 0
    %s8 = scalar_lea.sflag [#allocation3], 1
    %9 = vsyncpa %s8, 0
    %10 = vsyncpa [#allocation6], 0
    %s11 = scalar_lea.sflag [#allocation6], 1
    %12 = vsyncpa %s11, 0
    %13 = vsyncpa [#allocation4], 0
    %s14 = scalar_lea.sflag [#allocation4], 1
    %15 = vsyncpa %s14, 0
    loop: start=0, step=1, limit=4
    $region2: #{tpu_custom_call.1} parent=1 // loop_pre_header
      _
    $region3: #{tpu_custom_call.1} parent=1 // loop_header
      %s17 = sphi 0, %s21
      %p18 = scmp.ge.s32.totalorder %s17, 4
      %s24 = sphi 0, %s36
      %s25 = sphi 0, %s32
      %s26 = sphi 0, %s24
      %s27 = sphi 0, %s25
      %s28 = sphi 0, %s26
      %s29 = sphi 0, %s27
      %s41 = sphi 0, %s43
      %s44 = sphi 0, %s41
      %s45 = sphi 0, %s44
      %s61 = sphi 0, %s45
      %s67 = sphi 0, %s69
      %s70 = sphi 0, %s67
      %s71 = sphi 0, %s70
      %s87 = sphi 0, %s71
      %s95 = sphi 0, %s97
      %s98 = sphi 0, %s95
      %s99 = sphi 0, %s98
      %s115 = sphi 0, %s99
    $region4: #{tpu_custom_call.1} parent=1 // loop_header_branch
      %20 = sbr.rel (%p18) target = $region8
    $region5: #{tpu_custom_call.1} parent=1 // loop_body
      %s22 = ssub.s32 %s17, 1
      %s23 = ssub.s32 %s17, 2
      %s30 = sadd.s32 1, %s25
      %p31 = scmp.ge.s32.totalorder %s30, 1
      %s32 = scalar_select %p31, 0, %s30
      %s33 = sadd.s32 1, %s24
      %s34 = scalar_select %p31, %s33, %s24
      %p35 = scmp.ge.s32.totalorder %s34, 2
      %s36 = scalar_select %p35, 0, %s34
      %s37 = ssub.s32 %s24, %s36
      %s38 = ssub.s32 %s25, %s32
      %s39 = sor.u32 %s37, %s38
      %p40 = scmp.eq.s32.totalorder %s39, 0
      %s42 = sadd.s32 %s41, 1
      %s43 = scalar_select %p40, %s41, %s42
      %p46 = pneg %p40
      %p47 = scmp.eq.s32.totalorder %s17, 1
      %p48 = por %p46, %p47
      %p49 = scmp.ne.s32.totalorder %s41, %s44
      %p50 = scmp.eq.s32.totalorder %s17, 0
      %p51 = por %p49, %p50
      %p52 = scmp.ne.s32.totalorder %s41, %s44
      %p53 = scmp.eq.s32.totalorder %s22, 1
      %p54 = por %p52, %p53
      %p55 = scmp.ne.s32.totalorder %s44, %s45
      %p56 = scmp.eq.s32.totalorder %s22, 0
      %p57 = por %p55, %p56
      %p58 = scmp.ne.s32.totalorder %s44, %s45
      %p59 = scmp.eq.s32.totalorder %s23, 1
      %p60 = por %p58, %p59
      %p62 = scmp.ne.s32.totalorder %s45, %s61
      %p63 = scmp.eq.s32.totalorder %s23, 0
      %p64 = por %p62, %p63
      %s65 = ssub.s32 %s24, %s36
      %p66 = scmp.eq.s32.totalorder %s65, 0
      %s68 = sadd.s32 %s67, 1
      %s69 = scalar_select %p66, %s67, %s68
      %p72 = pneg %p66
      %p73 = scmp.eq.s32.totalorder %s17, 1
      %p74 = por %p72, %p73
      %p75 = scmp.ne.s32.totalorder %s67, %s70
      %p76 = scmp.eq.s32.totalorder %s17, 0
      %p77 = por %p75, %p76
      %p78 = scmp.ne.s32.totalorder %s67, %s70
      %p79 = scmp.eq.s32.totalorder %s22, 1
      %p80 = por %p78, %p79
      %p81 = scmp.ne.s32.totalorder %s70, %s71
      %p82 = scmp.eq.s32.totalorder %s22, 0
      %p83 = por %p81, %p82
      %p84 = scmp.ne.s32.totalorder %s70, %s71
      %p85 = scmp.eq.s32.totalorder %s23, 1
      %p86 = por %p84, %p85
      %p88 = scmp.ne.s32.totalorder %s71, %s87
      %p89 = scmp.eq.s32.totalorder %s23, 0
      %p90 = por %p88, %p89
      %s91 = ssub.s32 %s24, %s36
      %s92 = ssub.s32 %s25, %s32
      %s93 = sor.u32 %s91, %s92
      %p94 = scmp.eq.s32.totalorder %s93, 0
      %s96 = sadd.s32 %s95, 1
      %s97 = scalar_select %p94, %s95, %s96
      %p100 = pneg %p94
      %p101 = scmp.eq.s32.totalorder %s17, 1
      %p102 = por %p100, %p101
      %p103 = scmp.ne.s32.totalorder %s95, %s98
      %p104 = scmp.eq.s32.totalorder %s17, 0
      %p105 = por %p103, %p104
      %p106 = scmp.ne.s32.totalorder %s95, %s98
      %p107 = scmp.eq.s32.totalorder %s22, 1
      %p108 = por %p106, %p107
      %p109 = scmp.ne.s32.totalorder %s98, %s99
      %p110 = scmp.eq.s32.totalorder %s22, 0
      %p111 = por %p109, %p110
      %p112 = scmp.ne.s32.totalorder %s98, %s99
      %p113 = scmp.eq.s32.totalorder %s23, 1
      %p114 = por %p112, %p113
      %p116 = scmp.ne.s32.totalorder %s99, %s115
      %p117 = scmp.eq.s32.totalorder %s23, 0
      %p118 = por %p116, %p117
      %p119 = scmp.le.s32.totalorder 1, %s17
      %p120 = scmp.lt.s32.totalorder %s17, 3
      %p121 = pnand %p119, %p120
      %p122 = pneg %p121
      // Predicated region
      $region9: #{tpu_custom_call.1} parent=5 // pred_check
        _
      $region10: #{tpu_custom_call.1} parent=5 // pred_check_branch
        %124 = sbr.rel (%p121) target = $region12
      $region11: #{tpu_custom_call.1} parent=5 // pred_region
        %s125 = ssub.s32 %s17, 1
      $region12: #{tpu_custom_call.1} parent=5 // pred_fallthru
        _
      %p126 = scmp.lt.s32.totalorder %s17, 2
      // Predicated region
      $region13: #{tpu_custom_call.1} parent=5 // pred_check
        %p127 = pneg %p126
      $region14: #{tpu_custom_call.1} parent=5 // pred_check_branch
        %129 = sbr.rel (%p127) target = $region16
      $region15: #{tpu_custom_call.1} parent=5 // pred_region
        // Predicated region
        $region17: #{tpu_custom_call.1} parent=15 // pred_check
          %p130 = pneg %p51
        $region18: #{tpu_custom_call.1} parent=15 // pred_check_branch
          %132 = sbr.rel (%p130) target = $region20
        $region19: #{tpu_custom_call.1} parent=15 // pred_region
          %s133 = sand.u32 %s41, 1
          %s134 = scalar_lea.sflag [#allocation3], %s133
          %s135 = sand.u32 %s41, 1
          %s136 = smul.addr %s135, 8
          %s137 = scalar_lea.vmem [#allocation2], %s136
          %139 = vsyncadd %s134, 0
          %s140 = sadd.s32 %s25, %s24
          %s141 = smul.addr %s140, 8
          %s142 = scalar_lea.hbm %s0, %s141
          %s144 = sshll.u32 %s142, 4
          %s145 = int_to_ptr.hbm [resolvable:$true] %s144
          %s146 = sshll.u32 %s137, 4
          %s147 = int_to_ptr.vmem [resolvable:$true] %s146
          %149 = dma.hbm_to_vmem [thread:$0]  %s145, 128, %s147, %s134
        $region20: #{tpu_custom_call.1} parent=15 // pred_fallthru
          _
        // Predicated region
        $region21: #{tpu_custom_call.1} parent=15 // pred_check
          %p150 = pneg %p77
        $region22: #{tpu_custom_call.1} parent=15 // pred_check_branch
          %152 = sbr.rel (%p150) target = $region24
        $region23: #{tpu_custom_call.1} parent=15 // pred_region
          %s153 = sand.u32 %s67, 1
          %s154 = scalar_lea.sflag [#allocation6], %s153
          %s155 = sand.u32 %s67, 1
          %s156 = scalar_lea.vmem [#allocation5], %s155
          %158 = vsyncadd %s154, 0
          %s159 = scalar_lea.hbm %s1, %s24
          %s161 = sshll.u32 %s159, 4
          %s162 = int_to_ptr.hbm [resolvable:$true] %s161
          %s163 = sshll.u32 %s156, 4
          %s164 = int_to_ptr.vmem [resolvable:$true] %s163
          %166 = dma.hbm_to_vmem [thread:$0]  %s162, 16, %s164, %s154
        $region24: #{tpu_custom_call.1} parent=15 // pred_fallthru
          _
      $region16: #{tpu_custom_call.1} parent=5 // pred_fallthru
        _
      %p167 = scmp.le.s32.totalorder 1, %s17
      %p168 = scmp.lt.s32.totalorder %s17, 3
      %p169 = pnand %p167, %p168
      %p170 = pneg %p169
      // Predicated region
      $region25: #{tpu_custom_call.1} parent=5 // pred_check
        _
      $region26: #{tpu_custom_call.1} parent=5 // pred_check_branch
        %172 = sbr.rel (%p169) target = $region28
      $region27: #{tpu_custom_call.1} parent=5 // pred_region
        %s173 = ssub.s32 %s17, 1
        %s174 = sand.u32 %s44, 1
        %s175 = scalar_lea.sflag [#allocation3], %s174
        %s176 = sand.u32 %s44, 1
        %s177 = smul.addr %s176, 8
        %s178 = scalar_lea.vmem [#allocation2], %s177
        // Predicated region
        $region29: #{tpu_custom_call.1} parent=27 // pred_check
          %p179 = pneg %p57
        $region30: #{tpu_custom_call.1} parent=27 // pred_check_branch
          %181 = sbr.rel (%p179) target = $region32
        $region31: #{tpu_custom_call.1} parent=27 // pred_region
          %183 = dma.done %s175, 128
        $region32: #{tpu_custom_call.1} parent=27 // pred_fallthru
          _
        %s184 = sand.u32 %s70, 1
        %s185 = scalar_lea.sflag [#allocation6], %s184
        %s186 = sand.u32 %s70, 1
        %s187 = scalar_lea.vmem [#allocation5], %s186
        // Predicated region
        $region33: #{tpu_custom_call.1} parent=27 // pred_check
          %p188 = pneg %p83
        $region34: #{tpu_custom_call.1} parent=27 // pred_check_branch
          %190 = sbr.rel (%p188) target = $region36
        $region35: #{tpu_custom_call.1} parent=27 // pred_region
          %192 = dma.done %s185, 16
        $region36: #{tpu_custom_call.1} parent=27 // pred_fallthru
          _
        %s193 = sand.u32 %s44, 1
        %s194 = scalar_lea.sflag [#allocation3], %s193
        %s195 = sand.u32 %s44, 1
        %s196 = smul.addr %s195, 8
        %s197 = scalar_lea.vmem [#allocation2], %s196
        %p198 = pneg %p57
        %p199 = pneg %p54
        %s200 = sand.u32 %s70, 1
        %s201 = scalar_lea.sflag [#allocation6], %s200
        %s202 = sand.u32 %s70, 1
        %s203 = scalar_lea.vmem [#allocation5], %s202
        %p204 = pneg %p83
        %p205 = pneg %p80
        %p206 = pneg %p111
        %p207 = pneg %p108
        %s208 = sand.u32 %s98, 1
        %s209 = scalar_lea.sflag [#allocation4], %s208
        %s210 = sand.u32 %s98, 1
        %s211 = smul.addr %s210, 8
        %s212 = scalar_lea.vmem [#allocation7], %s211
        %v213 = vld [vmem:[%s178] sm:$0xff]
        %v214 = vld [vmem:[%s187] sm:$0x1]
        %v216 = vperm.slane %v214, 0
        %v218 = vmul.f32 %v213, %v216
        %vm219 = vcmask 261120
        %v220 = vsel %vm219, %v218, 0.0
        %221 = vadd.xlane.f32.xlu0 %v220
        %v222 = vpop.xlane.xlu0 %221
        %v223 = vmul.f32 %v213, %v213
        %v224 = vsel %vm219, %v223, 0.0
        %225 = vadd.xlane.f32.xlu0 %v224
        %v226 = vpop.xlane.xlu0 %225
        %v227 = vmul.f32 %v214, %v214
        %vm228 = vcmask 253952
        %v229 = vsel %vm228, %v227, 0.0
        %230 = vadd.xlane.f32.xlu0 %v229
        %v231 = vpop.xlane.xlu0 %230
        %v232 = vperm.slane %v231, 0
        %v233 = vmul.f32 %v226, %v232
        %v234 = vmax.f32 %v233, 1e-16
        %v235 = vrsqrt.pop %v234
        %v236 = vmul.f32 %v235, %v234
        %v237 = vmul.f32 %v236, %v235
        %v238 = vmul.f32 0.5, %v237
        %v239 = vsub.f32 1.5, %v238
        %v240 = vmul.f32 %v235, %v239
        %vm241 = vweird.f32 %v234
        %vm242 = vweird.f32 %v235
        %vm243 = vmor %vm241, %vm242
        %v244 = vsel %vm243, %v235, %v240
        %v245 = vmul.f32 %v222, %v244
        %v246 = vmul.f32 %v213, %v245
        %247 = vst.msk [vmem:[%s212] sm:$0xff] %vm219, %v246
        %s248 = sand.u32 %s98, 1
        %s249 = scalar_lea.sflag [#allocation4], %s248
        %s250 = sand.u32 %s98, 1
        %s251 = smul.addr %s250, 8
        %s252 = scalar_lea.vmem [#allocation7], %s251
        // Predicated region
        $region37: #{tpu_custom_call.1} parent=27 // pred_check
          %p253 = pneg %p108
        $region38: #{tpu_custom_call.1} parent=27 // pred_check_branch
          %255 = sbr.rel (%p253) target = $region40
        $region39: #{tpu_custom_call.1} parent=27 // pred_region
          %257 = vsyncadd %s249, 0
          %s258 = sadd.s32 %s27, %s26
          %s259 = smul.addr %s258, 8
          %s260 = scalar_lea.hbm %s2, %s259
          %s262 = sshll.u32 %s252, 4
          %s263 = int_to_ptr.vmem [resolvable:$true] %s262
          %s264 = sshll.u32 %s260, 4
          %s265 = int_to_ptr.hbm [resolvable:$true] %s264
          %267 = dma.vmem_to_hbm [thread:$0]  %s263, 128, %s265, %s249
        $region40: #{tpu_custom_call.1} parent=27 // pred_fallthru
          _
      $region28: #{tpu_custom_call.1} parent=5 // pred_fallthru
        _
      %p268 = scmp.le.s32.totalorder 2, %s17
      // Predicated region
      $region41: #{tpu_custom_call.1} parent=5 // pred_check
        %p269 = pneg %p268
      $region42: #{tpu_custom_call.1} parent=5 // pred_check_branch
        %271 = sbr.rel (%p269) target = $region44
      $region43: #{tpu_custom_call.1} parent=5 // pred_region
        %s272 = ssub.s32 %s17, 2
        // Predicated region
        $region45: #{tpu_custom_call.1} parent=43 // pred_check
          %p273 = pneg %p114
        $region46: #{tpu_custom_call.1} parent=43 // pred_check_branch
          %275 = sbr.rel (%p273) target = $region48
        $region47: #{tpu_custom_call.1} parent=43 // pred_region
          %s276 = sand.u32 %s99, 1
          %s277 = scalar_lea.sflag [#allocation4], %s276
          %s278 = sand.u32 %s99, 1
          %s279 = smul.addr %s278, 8
          %s280 = scalar_lea.vmem [#allocation7], %s279
          %282 = dma.done %s277, 128
        $region48: #{tpu_custom_call.1} parent=43 // pred_fallthru
          _
      $region44: #{tpu_custom_call.1} parent=5 // pred_fallthru
        _
    $region6: #{tpu_custom_call.1} parent=1 // loop_footer
      %s21 = sadd.s32 1, %s17
    $region7: #{tpu_custom_call.1} parent=1 // loop_footer_branch
      %16 = sbr.rel target = $region3
    $region8: #{tpu_custom_call.1} parent=1 // loop_exit
      _
    %283 = vsyncpa [#allocation3], 1
    %s284 = scalar_lea.sflag [#allocation3], 1
    %285 = vsyncpa %s284, 1
    %286 = vsyncpa [#allocation6], 1
    %s287 = scalar_lea.sflag [#allocation6], 1
    %288 = vsyncpa %s287, 1
    %289 = vsyncpa [#allocation4], 1
    %s290 = scalar_lea.sflag [#allocation4], 1
    %291 = vsyncpa %s290, 1

</llo_original>
